<compile_context>
chip_gen: v7x
topology: tpu7x:2x2x1
jax: 0.10.0
libtpu: 0.0.40
codegen_flags: <defaults>
</compile_context>

<pallas_src>
import functools

import jax
import jax.numpy as jnp
import numpy as np
from jax.experimental import pallas as pl
from jax.experimental.pallas import tpu as pltpu

_LANE = 128


def _round_up(x, m):
    return (x + m - 1) // m * m


def _pad_gate_cols(w, h, hp):
    """Zero-pad each of the 4 gate blocks along the last axis from h to hp."""
    if h == hp:
        return w
    lead = w.shape[:-1]
    w = w.reshape(lead + (4, h))
    w = jnp.pad(w, [(0, 0)] * (len(lead) + 1) + [(0, hp - h)])
    return w.reshape(lead + (4 * hp,))


def _prep_direction(w_ih, w_hh, b_ih, b_hh, h, hp, compute_dtype):
    """PyTorch-layout LSTM params -> transposed, lane-padded matrices.

    Returns:
      wih_t : (Din, 4*hp)  input projection (applied outside the kernel)
      whh_t : (hp, 4*hp)   recurrent weights (used inside the kernel)
      bias  : (1, 4*hp)    b_ih + b_hh, folded into the pre-gates
    """
    wih_t = _pad_gate_cols(jnp.asarray(w_ih, jnp.float32).T, h, hp)
    whh_t = _pad_gate_cols(jnp.asarray(w_hh, jnp.float32).T, h, hp)
    whh_t = jnp.pad(whh_t, ((0, hp - h), (0, 0)))
    bias = _pad_gate_cols((b_ih + b_hh).astype(jnp.float32)[None, :], h, hp)
    return wih_t, whh_t.astype(compute_dtype), bias


def _split_rows_padded(wih_t, h, hp):
    """Split a (2h, 4hp) input-projection matrix into forward-feature and
    backward-feature halves, each zero-padded to (hp, 4hp) rows, so layer 2
    never needs a materialised (T, N, 2H) concat."""
    a = jnp.pad(wih_t[:h], ((0, hp - h), (0, 0)))
    b = jnp.pad(wih_t[h:], ((0, hp - h), (0, 0)))
    return a, b


def _pre_gates(x_parts, w_parts, bias, compute_dtype):
    """pre_gates = sum_k x_parts[k] @ w_parts[k] + bias as big GEMMs (XLA)."""
    acc = None
    for xp, wp in zip(x_parts, w_parts):
        term = jnp.dot(xp.astype(compute_dtype), wp.astype(compute_dtype),
                       preferred_element_type=jnp.float32)
        acc = term if acc is None else acc + term
    return acc + bias


# -----------------------------------------------------------------------------
# Pallas kernel: one T-chunk of a fused forward+backward LSTM layer.
# -----------------------------------------------------------------------------
def _bilstm_chunk_kernel(pgf_ref, pgb_ref, whhf_ref, whhb_ref,
                         outf_ref, outb_ref, hf, cf, hb, cb):
    """pgf_ref/pgb_ref: (Tc, N, 4*Hp) f32 pre-gates (fwd order / reversed-chunk
    order).  whh*_ref: (Hp, 4*Hp).  out*_ref: (Tc, N, Hp).
    hf/cf/hb/cb: (N, Hp) f32 persistent state scratch."""

    @pl.when(pl.program_id(0) == 0)
    def _():
        hf[...] = jnp.zeros_like(hf)
        cf[...] = jnp.zeros_like(cf)
        hb[...] = jnp.zeros_like(hb)
        cb[...] = jnp.zeros_like(cb)

    tc = pgf_ref.shape[0]
    hp = hf.shape[1]
    # Loop-invariant loads hoisted out of the time loop.
    w_f = whhf_ref[...]
    w_b = whhb_ref[...]

    def cell(pre, h, c, w):
        gates = pre + jnp.dot(h.astype(w.dtype), w,
                              preferred_element_type=jnp.float32)
        # PyTorch gate order i, f, g, o; slices are 128-lane aligned (Hp pad).
        i = jax.nn.sigmoid(gates[:, 0 * hp:1 * hp])
        f = jax.nn.sigmoid(gates[:, 1 * hp:2 * hp])
        g = jnp.tanh(gates[:, 2 * hp:3 * hp])
        o = jax.nn.sigmoid(gates[:, 3 * hp:4 * hp])
        c_new = f * c + i * g
        h_new = o * jnp.tanh(c_new)
        return h_new, c_new

    @pl.loop(0, tc)
    def _(t):
        # Forward direction walks the chunk front-to-back.
        h_new, c_new = cell(pgf_ref[t], hf[...], cf[...], w_f)
        hf[...] = h_new
        cf[...] = c_new
        outf_ref[t] = h_new.astype(outf_ref.dtype)
        # Backward direction walks it back-to-front; its chunks arrive in
        # reversed order via the index_map, so this IS the reversed scan.
        tb = tc - 1 - t
        h_new, c_new = cell(pgb_ref[tb], hb[...], cb[...], w_b)
        hb[...] = h_new
        cb[...] = c_new
        outb_ref[tb] = h_new.astype(outb_ref.dtype)


def _bilstm_layer(pg_f, pg_b, whh_f, whh_b, hp, out_dtype, *,
                  max_chunk=256, stream_budget_bytes=16 * 1024 * 1024):
    """One fused bidirectional layer over pre-computed pre-gates.
    pg_f/pg_b: (T, N, 4*hp) f32.  Returns (out_f, out_b), each (T, N, hp)."""
    T, N, G = pg_f.shape
    out_bytes = jnp.dtype(out_dtype).itemsize
    # Streamed bytes per time step (pg_f + pg_b + out_f + out_b), x2 for
    # double buffering; pick the largest chunk that fits the budget.
    per_step = 2 * (2 * N * G * 4 + 2 * N * hp * out_bytes)
    tc = int(max(1, min(T, stream_budget_bytes // per_step, max_chunk)))
    n_chunks = int(pl.cdiv(T, tc))
    tp = n_chunks * tc
    if tp != T:
        # Zero pre-gates keep h = c = 0 exactly, so the padded tail is a
        # no-op for the recurrence of either direction.
        pad = ((0, tp - T), (0, 0), (0, 0))
        pg_f = jnp.pad(pg_f, pad)
        pg_b = jnp.pad(pg_b, pad)

    streamed = per_step * tc
    weight_bytes = 2 * int(whh_f.size) * whh_f.dtype.itemsize
    scratch_bytes = 4 * N * hp * 4
    vmem_limit = int(min(max(streamed + weight_bytes + scratch_bytes + (2 << 20),
                             16 << 20), 48 << 20))

    out_f, out_b = pl.pallas_call(
        _bilstm_chunk_kernel,
        out_shape=(jax.ShapeDtypeStruct((tp, N, hp), out_dtype),
                   jax.ShapeDtypeStruct((tp, N, hp), out_dtype)),
        grid=(n_chunks,),
        in_specs=[
            pl.BlockSpec((tc, N, G), lambda i: (i, 0, 0)),
            pl.BlockSpec((tc, N, G), lambda i: (n_chunks - 1 - i, 0, 0)),
            pl.BlockSpec((hp, G), lambda i: (0, 0)),
            pl.BlockSpec((hp, G), lambda i: (0, 0)),
        ],
        out_specs=(
            pl.BlockSpec((tc, N, hp), lambda i: (i, 0, 0)),
            pl.BlockSpec((tc, N, hp), lambda i: (n_chunks - 1 - i, 0, 0)),
        ),
        scratch_shapes=[pltpu.VMEM((N, hp), jnp.float32)] * 4,
        compiler_params=pltpu.CompilerParams(
            dimension_semantics=("arbitrary",),
            vmem_limit_bytes=vmem_limit),
    )(pg_f, pg_b, whh_f, whh_b)
    return out_f[:T], out_b[:T]


# -----------------------------------------------------------------------------
# EncoderWithRNN: num_layers=2, bidirectional=True
# -----------------------------------------------------------------------------
def init_encoder_params(key, in_channels, hidden_size):
    """Deterministic init mirroring nn.LSTM param shapes: U(-1/sqrt(H), 1/sqrt(H))."""
    H = hidden_size
    k = 1.0 / np.sqrt(H)
    params = []
    for layer in range(2):
        din = in_channels if layer == 0 else 2 * H
        layer_params = []
        for _direction in range(2):  # forward, reverse
            key, k1, k2, k3, k4 = jax.random.split(key, 5)
            w_ih = jax.random.uniform(k1, (4 * H, din), jnp.float32, -k, k)
            w_hh = jax.random.uniform(k2, (4 * H, H), jnp.float32, -k, k)
            b_ih = jax.random.uniform(k3, (4 * H,), jnp.float32, -k, k)
            b_hh = jax.random.uniform(k4, (4 * H,), jnp.float32, -k, k)
            layer_params.append((w_ih, w_hh, b_ih, b_hh))
        params.append(tuple(layer_params))
    return tuple(params)


@functools.partial(jax.jit, static_argnums=(2, 3, 4))
def encoder_with_rnn(x, params, hidden_size, compute_dtype=jnp.float32,
                     max_chunk=256):
    """x: (T, N, in_channels) -> (T, N, 2*hidden_size)."""
    h = hidden_size
    hp = _round_up(h, _LANE)
    T = x.shape[0]
    out_dtype = x.dtype
    (l0f, l0b), (l1f, l1b) = params

    # ---- layer 0: input projection as one big GEMM per direction ---------
    wih_f, whh_f, bias_f = _prep_direction(*l0f, h, hp, compute_dtype)
    wih_b, whh_b, bias_b = _prep_direction(*l0b, h, hp, compute_dtype)
    pg_f = _pre_gates([x], [wih_f], bias_f, compute_dtype)
    pg_b = _pre_gates([x], [wih_b], bias_b, compute_dtype)
    hf0, hb0 = _bilstm_layer(pg_f, pg_b, whh_f, whh_b, hp, out_dtype,
                             max_chunk=max_chunk)

    # ---- layer 1: consume the two direction outputs directly (no concat) --
    wih_f, whh_f, bias_f = _prep_direction(*l1f, h, hp, compute_dtype)
    wih_b, whh_b, bias_b = _prep_direction(*l1b, h, hp, compute_dtype)
    wih_f_a, wih_f_b = _split_rows_padded(wih_f, h, hp)
    wih_b_a, wih_b_b = _split_rows_padded(wih_b, h, hp)
    pg_f = _pre_gates([hf0, hb0], [wih_f_a, wih_f_b], bias_f, compute_dtype)
    pg_b = _pre_gates([hf0, hb0], [wih_b_a, wih_b_b], bias_b, compute_dtype)
    hf1, hb1 = _bilstm_layer(pg_f, pg_b, whh_f, whh_b, hp, out_dtype,
                             max_chunk=max_chunk)

    # Final (forward, reverse) feature concat, dropping the lane padding.
    return jnp.concatenate([hf1[..., :h], hb1[..., :h]], axis=-1)


# -----------------------------------------------------------------------------
# Pure-JAX reference (for the correctness check)
# -----------------------------------------------------------------------------
def _ref_lstm_direction(x, w_ih, w_hh, b_ih, b_hh):
    _, N, _ = x.shape
    H = w_hh.shape[1]

    def step(carry, xt):
        h, c = carry
        gates = xt @ w_ih.T + h @ w_hh.T + b_ih + b_hh
        i = jax.nn.sigmoid(gates[:, 0 * H:1 * H])
        f = jax.nn.sigmoid(gates[:, 1 * H:2 * H])
        g = jnp.tanh(gates[:, 2 * H:3 * H])
        o = jax.nn.sigmoid(gates[:, 3 * H:4 * H])
        c = f * c + i * g
        h = o * jnp.tanh(c)
        return (h, c), h

    h0 = jnp.zeros((N, H), jnp.float32)
    _, hs = jax.lax.scan(step, (h0, h0), x)
    return hs


def _ref_encoder(x, params):
    h = x
    for (p_fwd, p_bwd) in params:
        h_f = _ref_lstm_direction(h, *p_fwd)
        h_b = _ref_lstm_direction(h[::-1], *p_bwd)[::-1]
        h = jnp.concatenate([h_f, h_b], axis=-1)
    return h


if __name__ == "__main__":
    # Small shapes consistent with the forward: (seq, batch, in_channels)
    T, N, in_channels, hidden_size = 8, 2, 16, 32

    key = jax.random.PRNGKey(0)
    key, kx = jax.random.split(key)
    x = jax.random.normal(kx, (T, N, in_channels), jnp.float32)
    params = init_encoder_params(key, in_channels, hidden_size)

    ref = jax.block_until_ready(_ref_encoder(x, params))

    # f32 matmuls: tight check against the f32 reference.
    out = jax.block_until_ready(
        encoder_with_rnn(x, params, hidden_size, jnp.float32, 256))
    assert out.shape == (T, N, 2 * hidden_size), out.shape
    np.testing.assert_allclose(np.asarray(out), np.asarray(ref),
                               atol=1e-3, rtol=1e-3)

    # Exercise the multi-chunk grid (reversed block order + padded tail).
    out_chunked = jax.block_until_ready(
        encoder_with_rnn(x, params, hidden_size, jnp.float32, 3))
    np.testing.assert_allclose(np.asarray(out_chunked), np.asarray(ref),
                               atol=1e-3, rtol=1e-3)

    # bf16 matmul inputs (f32 accumulate, f32 cell state / gate math).
    out_bf16 = jax.block_until_ready(
        encoder_with_rnn(x, params, hidden_size, jnp.bfloat16, 256))
    np.testing.assert_allclose(np.asarray(out_bf16), np.asarray(ref),
                               atol=5e-2, rtol=5e-2)

    print("KERNEL_OK")
</pallas_src>

<mosaic_0001>
module attributes {stable_mosaic.version = 11 : i64} {
  func.func @_bilstm_chunk_kernel(%arg0: i32, %arg1: memref<8x2x512xf32, #tpu.memory_space<vmem>>, %arg2: memref<8x2x512xf32, #tpu.memory_space<vmem>>, %arg3: memref<128x512xf32, #tpu.memory_space<vmem>>, %arg4: memref<128x512xf32, #tpu.memory_space<vmem>>, %arg5: memref<8x2x128xf32, #tpu.memory_space<vmem>>, %arg6: memref<8x2x128xf32, #tpu.memory_space<vmem>>, %arg7: memref<2x128xf32, #tpu.memory_space<vmem>>, %arg8: memref<2x128xf32, #tpu.memory_space<vmem>>, %arg9: memref<2x128xf32, #tpu.memory_space<vmem>>, %arg10: memref<2x128xf32, #tpu.memory_space<vmem>>) attributes {dimension_semantics = [#tpu.dimension_semantics<arbitrary>], iteration_bounds = array<i64: 1>, scalar_prefetch = 0 : i64, scratch_operands = 4 : i64, tpu.core_type = #tpu.core_type<tc>, window_params = [{transform_indices = @transform_0, window_bounds = array<i64: 8, 2, 512>}, {transform_indices = @transform_1, window_bounds = array<i64: 8, 2, 512>}, {pipeline_mode = #tpu.pipeline_mode<synchronous>, transform_indices = @transform_2, window_bounds = array<i64: 128, 512>}, {pipeline_mode = #tpu.pipeline_mode<synchronous>, transform_indices = @transform_3, window_bounds = array<i64: 128, 512>}, {transform_indices = @transform_4, window_bounds = array<i64: 8, 2, 128>}, {transform_indices = @transform_5, window_bounds = array<i64: 8, 2, 128>}]} {
    %c0_i32 = arith.constant 0 : i32
    %0 = arith.cmpi eq, %arg0, %c0_i32 : i32
    %1 = arith.extui %0 : i1 to i32
    %c0_i32_0 = arith.constant 0 : i32
    %2 = arith.cmpi ne, %1, %c0_i32_0 : i32
    scf.if %2 {
      %cst = arith.constant 0.000000e+00 : f32
      %6 = vector.broadcast %cst : f32 to vector<2x128xf32>
      %c0_6 = arith.constant 0 : index
      %c0_7 = arith.constant 0 : index
      %7 = vector.load %arg7[%c0_6, %c0_7] : memref<2x128xf32, #tpu.memory_space<vmem>>, vector<2x128xf32>
      tpu.vector_store %arg7[%c0_6, %c0_7], %6 {strides = array<i32>} : memref<2x128xf32, #tpu.memory_space<vmem>>, vector<2x128xf32>,
      %cst_8 = arith.constant 0.000000e+00 : f32
      %8 = vector.broadcast %cst_8 : f32 to vector<2x128xf32>
      %c0_9 = arith.constant 0 : index
      %c0_10 = arith.constant 0 : index
      %9 = vector.load %arg8[%c0_9, %c0_10] : memref<2x128xf32, #tpu.memory_space<vmem>>, vector<2x128xf32>
      tpu.vector_store %arg8[%c0_9, %c0_10], %8 {strides = array<i32>} : memref<2x128xf32, #tpu.memory_space<vmem>>, vector<2x128xf32>,
      %cst_11 = arith.constant 0.000000e+00 : f32
      %10 = vector.broadcast %cst_11 : f32 to vector<2x128xf32>
      %c0_12 = arith.constant 0 : index
      %c0_13 = arith.constant 0 : index
      %11 = vector.load %arg9[%c0_12, %c0_13] : memref<2x128xf32, #tpu.memory_space<vmem>>, vector<2x128xf32>
      tpu.vector_store %arg9[%c0_12, %c0_13], %10 {strides = array<i32>} : memref<2x128xf32, #tpu.memory_space<vmem>>, vector<2x128xf32>,
      %cst_14 = arith.constant 0.000000e+00 : f32
      %12 = vector.broadcast %cst_14 : f32 to vector<2x128xf32>
      %c0_15 = arith.constant 0 : index
      %c0_16 = arith.constant 0 : index
      %13 = vector.load %arg10[%c0_15, %c0_16] : memref<2x128xf32, #tpu.memory_space<vmem>>, vector<2x128xf32>
      tpu.vector_store %arg10[%c0_15, %c0_16], %12 {strides = array<i32>} : memref<2x128xf32, #tpu.memory_space<vmem>>, vector<2x128xf32>,
    } else {
    }
    %c0 = arith.constant 0 : index
    %c0_1 = arith.constant 0 : index
    %3 = vector.load %arg3[%c0, %c0_1] : memref<128x512xf32, #tpu.memory_space<vmem>>, vector<128x512xf32>
    %c0_2 = arith.constant 0 : index
    %c0_3 = arith.constant 0 : index
    %4 = vector.load %arg4[%c0_2, %c0_3] : memref<128x512xf32, #tpu.memory_space<vmem>>, vector<128x512xf32>
    %c0_i32_4 = arith.constant 0 : i32
    %c8_i32 = arith.constant 8 : i32
    %5 = arith.addi %c0_i32_4, %c8_i32 : i32
    %c1_i32 = arith.constant 1 : i32
    scf.for %arg11 = %c0_i32_4 to %5 step %c1_i32  : i32 {
      %c1_i32_6 = arith.constant 1 : i32
      %6 = arith.muli %arg11, %c1_i32_6 : i32
      %c0_i32_7 = arith.constant 0 : i32
      %7 = arith.addi %c0_i32_7, %6 : i32
      %8 = arith.index_cast %7 : i32 to index
      %c0_8 = arith.constant 0 : index
      %c0_9 = arith.constant 0 : index
      %9 = vector.load %arg1[%8, %c0_8, %c0_9] : memref<8x2x512xf32, #tpu.memory_space<vmem>>, vector<1x2x512xf32>
      %10 = vector.shape_cast %9 : vector<1x2x512xf32> to vector<2x512xf32>
      %c0_10 = arith.constant 0 : index
      %c0_11 = arith.constant 0 : index
      %11 = vector.load %arg7[%c0_10, %c0_11] : memref<2x128xf32, #tpu.memory_space<vmem>>, vector<2x128xf32>
      %c0_12 = arith.constant 0 : index
      %c0_13 = arith.constant 0 : index
      %12 = vector.load %arg8[%c0_12, %c0_13] : memref<2x128xf32, #tpu.memory_space<vmem>>, vector<2x128xf32>
      %cst = arith.constant dense<0.000000e+00> : vector<2x512xf32>
      %13 = tpu.matmul %11, %3, %cst {dimension_numbers = #tpu.dot_dimension_numbers<[1], [0], [0], [1], [0, 0, 1, 1], [], []>} : vector<2x128xf32>, vector<128x512xf32>, vector<2x512xf32> -> vector<2x512xf32>
      %14 = arith.addf %10, %13 : vector<2x512xf32>
      %15 = vector.extract_strided_slice %14 {offsets = [0, 0], sizes = [2, 128], strides = [1, 1]} : vector<2x512xf32> to vector<2x128xf32>
      %16 = arith.negf %15 : vector<2x128xf32>
      %17 = math.exp %16 : vector<2x128xf32>
      %cst_14 = arith.constant 1.000000e+00 : f32
      %18 = vector.broadcast %cst_14 : f32 to vector<2x128xf32>
      %19 = arith.addf %18, %17 : vector<2x128xf32>
      %20 = arith.divf %18, %19 : vector<2x128xf32>
      %21 = vector.extract_strided_slice %14 {offsets = [0, 128], sizes = [2, 128], strides = [1, 1]} : vector<2x512xf32> to vector<2x128xf32>
      %22 = arith.negf %21 : vector<2x128xf32>
      %23 = math.exp %22 : vector<2x128xf32>
      %cst_15 = arith.constant 1.000000e+00 : f32
      %24 = vector.broadcast %cst_15 : f32 to vector<2x128xf32>
      %25 = arith.addf %24, %23 : vector<2x128xf32>
      %26 = arith.divf %24, %25 : vector<2x128xf32>
      %27 = vector.extract_strided_slice %14 {offsets = [0, 256], sizes = [2, 128], strides = [1, 1]} : vector<2x512xf32> to vector<2x128xf32>
      %28 = math.tanh %27 : vector<2x128xf32>
      %29 = vector.extract_strided_slice %14 {offsets = [0, 384], sizes = [2, 128], strides = [1, 1]} : vector<2x512xf32> to vector<2x128xf32>
      %30 = arith.negf %29 : vector<2x128xf32>
      %31 = math.exp %30 : vector<2x128xf32>
      %cst_16 = arith.constant 1.000000e+00 : f32
      %32 = vector.broadcast %cst_16 : f32 to vector<2x128xf32>
      %33 = arith.addf %32, %31 : vector<2x128xf32>
      %34 = arith.divf %32, %33 : vector<2x128xf32>
      %35 = arith.mulf %26, %12 : vector<2x128xf32>
      %36 = arith.mulf %20, %28 : vector<2x128xf32>
      %37 = arith.addf %35, %36 : vector<2x128xf32>
      %38 = math.tanh %37 : vector<2x128xf32>
      %39 = arith.mulf %34, %38 : vector<2x128xf32>
      %c0_17 = arith.constant 0 : index
      %c0_18 = arith.constant 0 : index
      %40 = vector.load %arg7[%c0_17, %c0_18] : memref<2x128xf32, #tpu.memory_space<vmem>>, vector<2x128xf32>
      tpu.vector_store %arg7[%c0_17, %c0_18], %39 {strides = array<i32>} : memref<2x128xf32, #tpu.memory_space<vmem>>, vector<2x128xf32>,
      %c0_19 = arith.constant 0 : index
      %c0_20 = arith.constant 0 : index
      %41 = vector.load %arg8[%c0_19, %c0_20] : memref<2x128xf32, #tpu.memory_space<vmem>>, vector<2x128xf32>
      tpu.vector_store %arg8[%c0_19, %c0_20], %37 {strides = array<i32>} : memref<2x128xf32, #tpu.memory_space<vmem>>, vector<2x128xf32>,
      %42 = arith.index_cast %7 : i32 to index
      %c0_21 = arith.constant 0 : index
      %c0_22 = arith.constant 0 : index
      %43 = vector.load %arg5[%42, %c0_21, %c0_22] : memref<8x2x128xf32, #tpu.memory_space<vmem>>, vector<1x2x128xf32>
      %44 = vector.shape_cast %43 : vector<1x2x128xf32> to vector<2x128xf32>
      %45 = vector.shape_cast %39 : vector<2x128xf32> to vector<1x2x128xf32>
      tpu.vector_store %arg5[%42, %c0_21, %c0_22], %45 {strides = array<i32>} : memref<8x2x128xf32, #tpu.memory_space<vmem>>, vector<1x2x128xf32>,
      %c7_i32 = arith.constant 7 : i32
      %46 = arith.subi %c7_i32, %7 : i32
      %47 = arith.index_cast %46 : i32 to index
      %c0_23 = arith.constant 0 : index
      %c0_24 = arith.constant 0 : index
      %48 = vector.load %arg2[%47, %c0_23, %c0_24] : memref<8x2x512xf32, #tpu.memory_space<vmem>>, vector<1x2x512xf32>
      %49 = vector.shape_cast %48 : vector<1x2x512xf32> to vector<2x512xf32>
      %c0_25 = arith.constant 0 : index
      %c0_26 = arith.constant 0 : index
      %50 = vector.load %arg9[%c0_25, %c0_26] : memref<2x128xf32, #tpu.memory_space<vmem>>, vector<2x128xf32>
      %c0_27 = arith.constant 0 : index
      %c0_28 = arith.constant 0 : index
      %51 = vector.load %arg10[%c0_27, %c0_28] : memref<2x128xf32, #tpu.memory_space<vmem>>, vector<2x128xf32>
      %cst_29 = arith.constant dense<0.000000e+00> : vector<2x512xf32>
      %52 = tpu.matmul %50, %4, %cst_29 {dimension_numbers = #tpu.dot_dimension_numbers<[1], [0], [0], [1], [0, 0, 1, 1], [], []>} : vector<2x128xf32>, vector<128x512xf32>, vector<2x512xf32> -> vector<2x512xf32>
      %53 = arith.addf %49, %52 : vector<2x512xf32>
      %54 = vector.extract_strided_slice %53 {offsets = [0, 0], sizes = [2, 128], strides = [1, 1]} : vector<2x512xf32> to vector<2x128xf32>
      %55 = arith.negf %54 : vector<2x128xf32>
      %56 = math.exp %55 : vector<2x128xf32>
      %cst_30 = arith.constant 1.000000e+00 : f32
      %57 = vector.broadcast %cst_30 : f32 to vector<2x128xf32>
      %58 = arith.addf %57, %56 : vector<2x128xf32>
      %59 = arith.divf %57, %58 : vector<2x128xf32>
      %60 = vector.extract_strided_slice %53 {offsets = [0, 128], sizes = [2, 128], strides = [1, 1]} : vector<2x512xf32> to vector<2x128xf32>
      %61 = arith.negf %60 : vector<2x128xf32>
      %62 = math.exp %61 : vector<2x128xf32>
      %cst_31 = arith.constant 1.000000e+00 : f32
      %63 = vector.broadcast %cst_31 : f32 to vector<2x128xf32>
      %64 = arith.addf %63, %62 : vector<2x128xf32>
      %65 = arith.divf %63, %64 : vector<2x128xf32>
      %66 = vector.extract_strided_slice %53 {offsets = [0, 256], sizes = [2, 128], strides = [1, 1]} : vector<2x512xf32> to vector<2x128xf32>
      %67 = math.tanh %66 : vector<2x128xf32>
      %68 = vector.extract_strided_slice %53 {offsets = [0, 384], sizes = [2, 128], strides = [1, 1]} : vector<2x512xf32> to vector<2x128xf32>
      %69 = arith.negf %68 : vector<2x128xf32>
      %70 = math.exp %69 : vector<2x128xf32>
      %cst_32 = arith.constant 1.000000e+00 : f32
      %71 = vector.broadcast %cst_32 : f32 to vector<2x128xf32>
      %72 = arith.addf %71, %70 : vector<2x128xf32>
      %73 = arith.divf %71, %72 : vector<2x128xf32>
      %74 = arith.mulf %65, %51 : vector<2x128xf32>
      %75 = arith.mulf %59, %67 : vector<2x128xf32>
      %76 = arith.addf %74, %75 : vector<2x128xf32>
      %77 = math.tanh %76 : vector<2x128xf32>
      %78 = arith.mulf %73, %77 : vector<2x128xf32>
      %c0_33 = arith.constant 0 : index
      %c0_34 = arith.constant 0 : index
      %79 = vector.load %arg9[%c0_33, %c0_34] : memref<2x128xf32, #tpu.memory_space<vmem>>, vector<2x128xf32>
      tpu.vector_store %arg9[%c0_33, %c0_34], %78 {strides = array<i32>} : memref<2x128xf32, #tpu.memory_space<vmem>>, vector<2x128xf32>,
      %c0_35 = arith.constant 0 : index
      %c0_36 = arith.constant 0 : index
      %80 = vector.load %arg10[%c0_35, %c0_36] : memref<2x128xf32, #tpu.memory_space<vmem>>, vector<2x128xf32>
      tpu.vector_store %arg10[%c0_35, %c0_36], %76 {strides = array<i32>} : memref<2x128xf32, #tpu.memory_space<vmem>>, vector<2x128xf32>,
      %81 = arith.index_cast %46 : i32 to index
      %c0_37 = arith.constant 0 : index
      %c0_38 = arith.constant 0 : index
      %82 = vector.load %arg6[%81, %c0_37, %c0_38] : memref<8x2x128xf32, #tpu.memory_space<vmem>>, vector<1x2x128xf32>
      %83 = vector.shape_cast %82 : vector<1x2x128xf32> to vector<2x128xf32>
      %84 = vector.shape_cast %78 : vector<2x128xf32> to vector<1x2x128xf32>
      tpu.vector_store %arg6[%81, %c0_37, %c0_38], %84 {strides = array<i32>} : memref<8x2x128xf32, #tpu.memory_space<vmem>>, vector<1x2x128xf32>,
    }
    %c8_i32_5 = arith.constant 8 : i32
    return
  }
  func.func @transform_0(%arg0: i32) -> (i32, i32, i32) {
    %c0_i32 = arith.constant 0 : i32
    %c0_i32_0 = arith.constant 0 : i32
    %c0_i32_1 = arith.constant 0 : i32
    return %arg0, %c0_i32, %c0_i32_0 : i32, i32, i32
  }
  func.func @transform_1(%arg0: i32) -> (i32, i32, i32) {
    %c0_i32 = arith.constant 0 : i32
    %0 = arith.subi %c0_i32, %arg0 : i32
    %c0_i32_0 = arith.constant 0 : i32
    %c0_i32_1 = arith.constant 0 : i32
    %c0_i32_2 = arith.constant 0 : i32
    return %0, %c0_i32_0, %c0_i32_1 : i32, i32, i32
  }
  func.func @transform_2(%arg0: i32) -> (i32, i32) {
    %c0_i32 = arith.constant 0 : i32
    %c0_i32_0 = arith.constant 0 : i32
    %c0_i32_1 = arith.constant 0 : i32
    return %c0_i32, %c0_i32_0 : i32, i32
  }
  func.func @transform_3(%arg0: i32) -> (i32, i32) {
    %c0_i32 = arith.constant 0 : i32
    %c0_i32_0 = arith.constant 0 : i32
    %c0_i32_1 = arith.constant 0 : i32
    return %c0_i32, %c0_i32_0 : i32, i32
  }
  func.func @transform_4(%arg0: i32) -> (i32, i32, i32) {
    %c0_i32 = arith.constant 0 : i32
    %c0_i32_0 = arith.constant 0 : i32
    %c0_i32_1 = arith.constant 0 : i32
    return %arg0, %c0_i32, %c0_i32_0 : i32, i32, i32
  }
  func.func @transform_5(%arg0: i32) -> (i32, i32, i32) {
    %c0_i32 = arith.constant 0 : i32
    %0 = arith.subi %c0_i32, %arg0 : i32
    %c0_i32_0 = arith.constant 0 : i32
    %c0_i32_1 = arith.constant 0 : i32
    %c0_i32_2 = arith.constant 0 : i32
    return %0, %c0_i32_0, %c0_i32_1 : i32, i32, i32
  }
}

</mosaic_0001>

<llo_original>
// kernel: encoder_with_rnn.2
$region0: #{encoder_with_rnn.2}
  #allocation0 [shape = 'u32[]', space=smem, size = 0x4, offset = 0x4, fixed_abs, tag = 'smem constant byte address 0x4 - core index']
  #allocation1 [shape = 'u32[144,128]{1,0:T(1,128)}', space=vmem, size = 0x12000, scoped, tag = 'internal scratch']
  #allocation2 [shape = 'f32[2,128]{1,0:T(2,128)}', space=vmem, size = 0x400, scoped, tag = 'scratch operand']
  #allocation3 [shape = 'f32[2,128]{1,0:T(2,128)}', space=vmem, size = 0x400, scoped, tag = 'scratch operand']
  #allocation4 [shape = 'f32[2,128]{1,0:T(2,128)}', space=vmem, size = 0x400, scoped, tag = 'scratch operand']
  #allocation5 [shape = 'f32[2,128]{1,0:T(2,128)}', space=vmem, size = 0x400, scoped, tag = 'scratch operand']
  %s0 = inlined_call_operand.vmem [shape: f32[8,2,512], index: 0, kind: input, shape index: {}]
  %s1 = inlined_call_operand.vmem [shape: f32[8,2,512], index: 1, kind: input, shape index: {}]
  %s2 = inlined_call_operand.vmem [shape: f32[128,512], index: 2, kind: input, shape index: {}]
  %s3 = inlined_call_operand.vmem [shape: f32[128,512], index: 3, kind: input, shape index: {}]
  %s4 = inlined_call_operand.vmem [shape: f32[8,2,128], index: 4, kind: output, shape index: {0}]
  %s5 = inlined_call_operand.vmem [shape: f32[8,2,128], index: 5, kind: output, shape index: {1}]
  %6 = xla_tuple %s4, %s5
  %s7 = sld [smem:[#allocation0]]
  $region45: #{encoder_with_rnn.2} parent=0
    _
  %s9 = ssub.s32 1, %s7
  %s10 = scalar_select 0, %s9, %s7
  // Predicated region
  $region2: #{encoder_with_rnn.2} parent=0 // pred_check
    _
  $region3: #{encoder_with_rnn.2} parent=0 // pred_check_branch
    %12 = sbr.rel (0) target = $region5
  $region4: #{encoder_with_rnn.2} parent=0 // pred_region
    _
  $region5: #{encoder_with_rnn.2} parent=0 // pred_fallthru
    _
  // Predicated region
  $region6: #{encoder_with_rnn.2} parent=0 // pred_check
    _
  $region7: #{encoder_with_rnn.2} parent=0 // pred_check_branch
    %14 = sbr.rel (0) target = $region9
  $region8: #{encoder_with_rnn.2} parent=0 // pred_region
    %s15 = ssub.s32 0, 0
    %s16 = smul.u32 8, %s15
    %p17 = scmp.lt.s32.totalorder %s16, 7
    %s18 = scalar_select %p17, %s16, 7
    %s19 = smul.addr %s18, 4
    %s20 = smul.addr %s19, 2
    %s21 = scalar_lea.vmem %s1, %s20
    %s22 = ssub.s32 0, 0
    %s23 = smul.u32 8, %s22
  $region9: #{encoder_with_rnn.2} parent=0 // pred_fallthru
    _
  // Predicated region
  $region10: #{encoder_with_rnn.2} parent=0 // pred_check
    _
  $region11: #{encoder_with_rnn.2} parent=0 // pred_check_branch
    %25 = sbr.rel (0) target = $region13
  $region12: #{encoder_with_rnn.2} parent=0 // pred_region
    _
  $region13: #{encoder_with_rnn.2} parent=0 // pred_fallthru
    _
  // Predicated region
  $region14: #{encoder_with_rnn.2} parent=0 // pred_check
    _
  $region15: #{encoder_with_rnn.2} parent=0 // pred_check_branch
    %27 = sbr.rel (0) target = $region17
  $region16: #{encoder_with_rnn.2} parent=0 // pred_region
    _
  $region17: #{encoder_with_rnn.2} parent=0 // pred_fallthru
    _
  %s28 = ssub.s32 0, 0
  %s29 = smul.u32 8, %s28
  %p30 = scmp.lt.s32.totalorder %s29, 7
  %s31 = scalar_select %p30, %s29, 7
  %s32 = smul.addr %s31, 4
  %s33 = smul.addr %s32, 2
  %s34 = scalar_lea.vmem %s1, %s33
  %s35 = ssub.s32 0, 0
  %s36 = smul.u32 8, %s35
  %p37 = scmp.lt.s32.totalorder %s36, 7
  %s38 = scalar_select %p37, %s36, 7
  %s39 = smul.addr %s38, 2
  %s40 = scalar_lea.vmem %s5, %s39
  %s41 = ssub.s32 0, 0
  %s42 = smul.u32 8, %s41
  %p43 = scmp.lt.s32.totalorder %s42, 7
  %s44 = scalar_select %p43, %s42, 7
  %s45 = smul.addr %s44, 4
  %s46 = smul.addr %s45, 2
  %s47 = scalar_lea.vmem %s1, %s46
  %s48 = ssub.s32 0, 0
  %s49 = smul.u32 8, %s48
  %s50 = ssub.s32 0, 0
  %s51 = smul.u32 8, %s50
  %p52 = scmp.lt.s32.totalorder %s51, 7
  %s53 = scalar_select %p52, %s51, 7
  %s54 = smul.addr %s53, 2
  %s55 = scalar_lea.vmem %s5, %s54
  %s56 = ssub.s32 0, 0
  %s57 = smul.u32 8, %s56
  %p58 = scmp.eq.s32.totalorder 0, 0
  // Predicated region
  $region18: #{encoder_with_rnn.2} parent=0 // pred_check
    %p59 = pneg %p58
  $region19: #{encoder_with_rnn.2} parent=0 // pred_check_branch
    %61 = sbr.rel (%p59) target = $region21
  $region20: #{encoder_with_rnn.2} parent=0 // pred_region
    %62 = vst [vmem:[#allocation2] sm:$0x3] 0.0
    %63 = vst [vmem:[#allocation3] sm:$0x3] 0.0
    %64 = vst [vmem:[#allocation4] sm:$0x3] 0.0
    %65 = vst [vmem:[#allocation5] sm:$0x3] 0.0
  $region21: #{encoder_with_rnn.2} parent=0 // pred_fallthru
    _
  %v66 = vld [vmem:[%s2] sm:$0xff]
  %v67 = vld [vmem:[%s2 + $0x8] sm:$0xff]
  %v68 = vld [vmem:[%s2 + $0x10] sm:$0xff]
  %v69 = vld [vmem:[%s2 + $0x18] sm:$0xff]
  %v70 = vld [vmem:[%s2 + $0x20] sm:$0xff]
  %v71 = vld [vmem:[%s2 + $0x28] sm:$0xff]
  %v72 = vld [vmem:[%s2 + $0x30] sm:$0xff]
  %v73 = vld [vmem:[%s2 + $0x38] sm:$0xff]
  %v74 = vld [vmem:[%s2 + $0x40] sm:$0xff]
  %v75 = vld [vmem:[%s2 + $0x48] sm:$0xff]
  %v76 = vld [vmem:[%s2 + $0x50] sm:$0xff]
  %v77 = vld [vmem:[%s2 + $0x58] sm:$0xff]
  %v78 = vld [vmem:[%s2 + $0x60] sm:$0xff]
  %v79 = vld [vmem:[%s2 + $0x68] sm:$0xff]
  %v80 = vld [vmem:[%s2 + $0x70] sm:$0xff]
  %v81 = vld [vmem:[%s2 + $0x78] sm:$0xff]
  %v82 = vld [vmem:[%s2 + $0x80] sm:$0xff]
  %v83 = vld [vmem:[%s2 + $0x88] sm:$0xff]
  %v84 = vld [vmem:[%s2 + $0x90] sm:$0xff]
  %v85 = vld [vmem:[%s2 + $0x98] sm:$0xff]
  %v86 = vld [vmem:[%s2 + $0xa0] sm:$0xff]
  %v87 = vld [vmem:[%s2 + $0xa8] sm:$0xff]
  %v88 = vld [vmem:[%s2 + $0xb0] sm:$0xff]
  %v89 = vld [vmem:[%s2 + $0xb8] sm:$0xff]
  %v90 = vld [vmem:[%s2 + $0xc0] sm:$0xff]
  %v91 = vld [vmem:[%s2 + $0xc8] sm:$0xff]
  %v92 = vld [vmem:[%s2 + $0xd0] sm:$0xff]
  %v93 = vld [vmem:[%s2 + $0xd8] sm:$0xff]
  %v94 = vld [vmem:[%s2 + $0xe0] sm:$0xff]
  %v95 = vld [vmem:[%s2 + $0xe8] sm:$0xff]
  %v96 = vld [vmem:[%s2 + $0xf0] sm:$0xff]
  %v97 = vld [vmem:[%s2 + $0xf8] sm:$0xff]
  %v98 = vld [vmem:[%s2 + $0x100] sm:$0xff]
  %v99 = vld [vmem:[%s2 + $0x108] sm:$0xff]
  %v100 = vld [vmem:[%s2 + $0x110] sm:$0xff]
  %v101 = vld [vmem:[%s2 + $0x118] sm:$0xff]
  %v102 = vld [vmem:[%s2 + $0x120] sm:$0xff]
  %v103 = vld [vmem:[%s2 + $0x128] sm:$0xff]
  %v104 = vld [vmem:[%s2 + $0x130] sm:$0xff]
  %v105 = vld [vmem:[%s2 + $0x138] sm:$0xff]
  %v106 = vld [vmem:[%s2 + $0x140] sm:$0xff]
  %v107 = vld [vmem:[%s2 + $0x148] sm:$0xff]
  %v108 = vld [vmem:[%s2 + $0x150] sm:$0xff]
  %v109 = vld [vmem:[%s2 + $0x158] sm:$0xff]
  %v110 = vld [vmem:[%s2 + $0x160] sm:$0xff]
  %v111 = vld [vmem:[%s2 + $0x168] sm:$0xff]
  %v112 = vld [vmem:[%s2 + $0x170] sm:$0xff]
  %v113 = vld [vmem:[%s2 + $0x178] sm:$0xff]
  %v114 = vld [vmem:[%s2 + $0x180] sm:$0xff]
  %v115 = vld [vmem:[%s2 + $0x188] sm:$0xff]
  %v116 = vld [vmem:[%s2 + $0x190] sm:$0xff]
  %v117 = vld [vmem:[%s2 + $0x198] sm:$0xff]
  %v118 = vld [vmem:[%s2 + $0x1a0] sm:$0xff]
  %v119 = vld [vmem:[%s2 + $0x1a8] sm:$0xff]
  %v120 = vld [vmem:[%s2 + $0x1b0] sm:$0xff]
  %v121 = vld [vmem:[%s2 + $0x1b8] sm:$0xff]
  %v122 = vld [vmem:[%s2 + $0x1c0] sm:$0xff]
  %v123 = vld [vmem:[%s2 + $0x1c8] sm:$0xff]
  %v124 = vld [vmem:[%s2 + $0x1d0] sm:$0xff]
  %v125 = vld [vmem:[%s2 + $0x1d8] sm:$0xff]
  %v126 = vld [vmem:[%s2 + $0x1e0] sm:$0xff]
  %v127 = vld [vmem:[%s2 + $0x1e8] sm:$0xff]
  %v128 = vld [vmem:[%s2 + $0x1f0] sm:$0xff]
  %v129 = vld [vmem:[%s2 + $0x1f8] sm:$0xff]
  %v130 = vld [vmem:[%s3] sm:$0xff]
  %v131 = vld [vmem:[%s3 + $0x8] sm:$0xff]
  %v132 = vld [vmem:[%s3 + $0x10] sm:$0xff]
  %v133 = vld [vmem:[%s3 + $0x18] sm:$0xff]
  %v134 = vld [vmem:[%s3 + $0x20] sm:$0xff]
  %v135 = vld [vmem:[%s3 + $0x28] sm:$0xff]
  %v136 = vld [vmem:[%s3 + $0x30] sm:$0xff]
  %v137 = vld [vmem:[%s3 + $0x38] sm:$0xff]
  %v138 = vld [vmem:[%s3 + $0x40] sm:$0xff]
  %v139 = vld [vmem:[%s3 + $0x48] sm:$0xff]
  %v140 = vld [vmem:[%s3 + $0x50] sm:$0xff]
  %v141 = vld [vmem:[%s3 + $0x58] sm:$0xff]
  %v142 = vld [vmem:[%s3 + $0x60] sm:$0xff]
  %v143 = vld [vmem:[%s3 + $0x68] sm:$0xff]
  %v144 = vld [vmem:[%s3 + $0x70] sm:$0xff]
  %v145 = vld [vmem:[%s3 + $0x78] sm:$0xff]
  %v146 = vld [vmem:[%s3 + $0x80] sm:$0xff]
  %v147 = vld [vmem:[%s3 + $0x88] sm:$0xff]
  %v148 = vld [vmem:[%s3 + $0x90] sm:$0xff]
  %v149 = vld [vmem:[%s3 + $0x98] sm:$0xff]
  %v150 = vld [vmem:[%s3 + $0xa0] sm:$0xff]
  %v151 = vld [vmem:[%s3 + $0xa8] sm:$0xff]
  %v152 = vld [vmem:[%s3 + $0xb0] sm:$0xff]
  %v153 = vld [vmem:[%s3 + $0xb8] sm:$0xff]
  %v154 = vld [vmem:[%s3 + $0xc0] sm:$0xff]
  %v155 = vld [vmem:[%s3 + $0xc8] sm:$0xff]
  %v156 = vld [vmem:[%s3 + $0xd0] sm:$0xff]
  %v157 = vld [vmem:[%s3 + $0xd8] sm:$0xff]
  %v158 = vld [vmem:[%s3 + $0xe0] sm:$0xff]
  %v159 = vld [vmem:[%s3 + $0xe8] sm:$0xff]
  %v160 = vld [vmem:[%s3 + $0xf0] sm:$0xff]
  %v161 = vld [vmem:[%s3 + $0xf8] sm:$0xff]
  %v162 = vld [vmem:[%s3 + $0x100] sm:$0xff]
  %v163 = vld [vmem:[%s3 + $0x108] sm:$0xff]
  %v164 = vld [vmem:[%s3 + $0x110] sm:$0xff]
  %v165 = vld [vmem:[%s3 + $0x118] sm:$0xff]
  %v166 = vld [vmem:[%s3 + $0x120] sm:$0xff]
  %v167 = vld [vmem:[%s3 + $0x128] sm:$0xff]
  %v168 = vld [vmem:[%s3 + $0x130] sm:$0xff]
  %v169 = vld [vmem:[%s3 + $0x138] sm:$0xff]
  %v170 = vld [vmem:[%s3 + $0x140] sm:$0xff]
  %v171 = vld [vmem:[%s3 + $0x148] sm:$0xff]
  %v172 = vld [vmem:[%s3 + $0x150] sm:$0xff]
  %v173 = vld [vmem:[%s3 + $0x158] sm:$0xff]
  %v174 = vld [vmem:[%s3 + $0x160] sm:$0xff]
  %v175 = vld [vmem:[%s3 + $0x168] sm:$0xff]
  %v176 = vld [vmem:[%s3 + $0x170] sm:$0xff]
  %v177 = vld [vmem:[%s3 + $0x178] sm:$0xff]
  %v178 = vld [vmem:[%s3 + $0x180] sm:$0xff]
  %v179 = vld [vmem:[%s3 + $0x188] sm:$0xff]
  %v180 = vld [vmem:[%s3 + $0x190] sm:$0xff]
  %v181 = vld [vmem:[%s3 + $0x198] sm:$0xff]
  %v182 = vld [vmem:[%s3 + $0x1a0] sm:$0xff]
  %v183 = vld [vmem:[%s3 + $0x1a8] sm:$0xff]
  %v184 = vld [vmem:[%s3 + $0x1b0] sm:$0xff]
  %v185 = vld [vmem:[%s3 + $0x1b8] sm:$0xff]
  %v186 = vld [vmem:[%s3 + $0x1c0] sm:$0xff]
  %v187 = vld [vmem:[%s3 + $0x1c8] sm:$0xff]
  %v188 = vld [vmem:[%s3 + $0x1d0] sm:$0xff]
  %v189 = vld [vmem:[%s3 + $0x1d8] sm:$0xff]
  %v190 = vld [vmem:[%s3 + $0x1e0] sm:$0xff]
  %v191 = vld [vmem:[%s3 + $0x1e8] sm:$0xff]
  %v192 = vld [vmem:[%s3 + $0x1f0] sm:$0xff]
  %v193 = vld [vmem:[%s3 + $0x1f8] sm:$0xff]
  loop: start=0, step=1, limit=8
  $region22: #{encoder_with_rnn.2} parent=0 // loop_pre_header
    _
  $region23: #{encoder_with_rnn.2} parent=0 // loop_header
    %s195 = sphi 0, %s199
    %p196 = scmp.ge.s32.totalorder %s195, 8
  $region24: #{encoder_with_rnn.2} parent=0 // loop_header_branch
    %198 = sbr.rel (%p196) target = $region28
  $region25: #{encoder_with_rnn.2} parent=0 // loop_body
    %s200 = smul.u32 %s195, 4
    %s201 = smul.addr %s200, 2
    %s202 = scalar_lea.vmem %s0, %s201
    %v203 = vld [vmem:[%s202] sm:$0xff]
    %v204 = vld [vmem:[#allocation2] sm:$0x3]
    %v205 = vld [vmem:[#allocation3] sm:$0x3]
    %206 = vmatprep.subr.mxu0 %v67
    %207 = vmatpush1.msra.mxu0 %v66
    %208 = vmatprep.subr.mxu0 %v71
    %209 = vmatpush1.msra.mxu0 %v70
    %210 = vmatprep.subr.mxu0 %v75
    %211 = vmatpush1.msra.mxu0 %v74
    %212 = vmatprep.subr.mxu0 %v79
    %213 = vmatpush1.msra.mxu0 %v78
    %214 = vmatprep.subr.mxu0 %v83
    %215 = vmatpush1.msra.mxu0 %v82
    %216 = vmatprep.subr.mxu0 %v87
    %217 = vmatpush1.msra.mxu0 %v86
    %218 = vmatprep.subr.mxu0 %v91
    %219 = vmatpush1.msra.mxu0 %v90
    %220 = vmatprep.subr.mxu0 %v95
    %221 = vmatpush1.msra.mxu0 %v94
    %222 = vmatprep.subr.mxu0 %v99
    %223 = vmatpush1.msra.mxu0 %v98
    %224 = vmatprep.subr.mxu0 %v103
    %225 = vmatpush1.msra.mxu0 %v102
    %226 = vmatprep.subr.mxu0 %v107
    %227 = vmatpush1.msra.mxu0 %v106
    %228 = vmatprep.subr.mxu0 %v111
    %229 = vmatpush1.msra.mxu0 %v110
    %230 = vmatprep.subr.mxu0 %v115
    %231 = vmatpush1.msra.mxu0 %v114
    %232 = vmatprep.subr.mxu0 %v119
    %233 = vmatpush1.msra.mxu0 %v118
    %234 = vmatprep.subr.mxu0 %v123
    %235 = vmatpush1.msra.mxu0 %v122
    %236 = vmatprep.subr.mxu0 %v127
    %237 = vmatpush1.msra.mxu0 %v126
    %238 = vmatprep.subr.mxu0 0.0
    %239 = vmatpush1.msra.mxu0 0.0
    %240 = vmatprep.subr.mxu0 0.0
    %241 = vmatpush1.msra.mxu0 0.0
    %242 = vmatprep.subr.mxu0 0.0
    %243 = vmatpush1.msra.mxu0 0.0
    %244 = vmatprep.subr.mxu0 0.0
    %245 = vmatpush1.msra.mxu0 0.0
    %246 = vmatprep.subr.mxu0 0.0
    %247 = vmatpush1.msra.mxu0 0.0
    %248 = vmatprep.subr.mxu0 0.0
    %249 = vmatpush1.msra.mxu0 0.0
    %250 = vmatprep.subr.mxu0 0.0
    %251 = vmatpush1.msra.mxu0 0.0
    %252 = vmatprep.subr.mxu0 0.0
    %253 = vmatpush1.msra.mxu0 0.0
    %254 = vmatprep.subr.mxu0 0.0
    %255 = vmatpush1.msra.mxu0 0.0
    %256 = vmatprep.subr.mxu0 0.0
    %257 = vmatpush1.msra.mxu0 0.0
    %258 = vmatprep.subr.mxu0 0.0
    %259 = vmatpush1.msra.mxu0 0.0
    %260 = vmatprep.subr.mxu0 0.0
    %261 = vmatpush1.msra.mxu0 0.0
    %262 = vmatprep.subr.mxu0 0.0
    %263 = vmatpush1.msra.mxu0 0.0
    %264 = vmatprep.subr.mxu0 0.0
    %265 = vmatpush1.msra.mxu0 0.0
    %266 = vmatprep.subr.mxu0 0.0
    %267 = vmatpush1.msra.mxu0 0.0
    %268 = vmatprep.subr.mxu0 0.0
    %269 = vmatpush1.msra.mxu0 0.0
    %270 = vmatprep.mubr.f32.mxu0 0.0
    %271 = vmatmul.mubr.f32.gmra.mrb[0].mxu0 %v204
    %v272 = vpop.f32.mrb[0].mxu0
    %v273 = vadd.f32 0.0, %v272
    %v274 = vpop.f32.mrb[0].mxu0
    %v275 = vadd.f32 0.0, %v274
    %276 = vdwg.mxu0
    %277 = vmatprep.subr.mxu0 %v69
    %278 = vmatpush1.msra.mxu0 %v68
    %279 = vmatprep.subr.mxu0 %v73
    %280 = vmatpush1.msra.mxu0 %v72
    %281 = vmatprep.subr.mxu0 %v77
    %282 = vmatpush1.msra.mxu0 %v76
    %283 = vmatprep.subr.mxu0 %v81
    %284 = vmatpush1.msra.mxu0 %v80
    %285 = vmatprep.subr.mxu0 %v85
    %286 = vmatpush1.msra.mxu0 %v84
    %287 = vmatprep.subr.mxu0 %v89
    %288 = vmatpush1.msra.mxu0 %v88
    %289 = vmatprep.subr.mxu0 %v93
    %290 = vmatpush1.msra.mxu0 %v92
    %291 = vmatprep.subr.mxu0 %v97
    %292 = vmatpush1.msra.mxu0 %v96
    %293 = vmatprep.subr.mxu0 %v101
    %294 = vmatpush1.msra.mxu0 %v100
    %295 = vmatprep.subr.mxu0 %v105
    %296 = vmatpush1.msra.mxu0 %v104
    %297 = vmatprep.subr.mxu0 %v109
    %298 = vmatpush1.msra.mxu0 %v108
    %299 = vmatprep.subr.mxu0 %v113
    %300 = vmatpush1.msra.mxu0 %v112
    %301 = vmatprep.subr.mxu0 %v117
    %302 = vmatpush1.msra.mxu0 %v116
    %303 = vmatprep.subr.mxu0 %v121
    %304 = vmatpush1.msra.mxu0 %v120
    %305 = vmatprep.subr.mxu0 %v125
    %306 = vmatpush1.msra.mxu0 %v124
    %307 = vmatprep.subr.mxu0 %v129
    %308 = vmatpush1.msra.mxu0 %v128
    %309 = vmatprep.subr.mxu0 0.0
    %310 = vmatpush1.msra.mxu0 0.0
    %311 = vmatprep.subr.mxu0 0.0
    %312 = vmatpush1.msra.mxu0 0.0
    %313 = vmatprep.subr.mxu0 0.0
    %314 = vmatpush1.msra.mxu0 0.0
    %315 = vmatprep.subr.mxu0 0.0
    %316 = vmatpush1.msra.mxu0 0.0
    %317 = vmatprep.subr.mxu0 0.0
    %318 = vmatpush1.msra.mxu0 0.0
    %319 = vmatprep.subr.mxu0 0.0
    %320 = vmatpush1.msra.mxu0 0.0
    %321 = vmatprep.subr.mxu0 0.0
    %322 = vmatpush1.msra.mxu0 0.0
    %323 = vmatprep.subr.mxu0 0.0
    %324 = vmatpush1.msra.mxu0 0.0
    %325 = vmatprep.subr.mxu0 0.0
    %326 = vmatpush1.msra.mxu0 0.0
    %327 = vmatprep.subr.mxu0 0.0
    %328 = vmatpush1.msra.mxu0 0.0
    %329 = vmatprep.subr.mxu0 0.0
    %330 = vmatpush1.msra.mxu0 0.0
    %331 = vmatprep.subr.mxu0 0.0
    %332 = vmatpush1.msra.mxu0 0.0
    %333 = vmatprep.subr.mxu0 0.0
    %334 = vmatpush1.msra.mxu0 0.0
    %335 = vmatprep.subr.mxu0 0.0
    %336 = vmatpush1.msra.mxu0 0.0
    %337 = vmatprep.subr.mxu0 0.0
    %338 = vmatpush1.msra.mxu0 0.0
    %339 = vmatprep.subr.mxu0 0.0
    %340 = vmatpush1.msra.mxu0 0.0
    %341 = vmatprep.mubr.f32.mxu0 0.0
    %342 = vmatmul.mubr.f32.gmra.mrb[0].mxu0 %v204
    %v343 = vpop.f32.mrb[0].mxu0
    %v344 = vadd.f32 0.0, %v343
    %v345 = vpop.f32.mrb[0].mxu0
    %v346 = vadd.f32 0.0, %v345
    %347 = vdwg.mxu0
    %v352 = vcombine.low %v273, %v275
    %v353 = vcombine.low %v344, %v346
    %v355 = vunpack.c.l.s4 1983009808
    %v356 = vunpack.c.0.s8 %v355
    %v357 = vlaneseq
    %v358 = vshrl.u32 %v357, 7
    %v359 = vsub.s32 %v356, %v358
    %v360 = vrot.slane %v352, %v359
    %v362 = vunpack.c.l.s4 1983009808
    %v363 = vunpack.c.0.s8 %v362
    %v364 = vlaneseq
    %v365 = vshrl.u32 %v364, 7
    %v366 = vsub.s32 %v363, %v365
    %v367 = vrot.slane %v353, %v366
    %v368 = vcombine.low %v360, %v367
    %v370 = vadd.f32 %v203, %v368
    %v371 = vxor.u32 %v370, 2147483648
    %v372 = vmul.f32 %v371, 1.442695
    %v373 = vpow.pop %v372
    %v374 = vadd.f32 %v373, 1.0
    %v375 = vrcp.pop %v374
    %v376 = vmul.f32 1.0, %v375
    %v378 = vrot.slane %v370, 2
    %v380 = vxor.u32 %v378, 2147483648
    %v381 = vmul.f32 %v380, 1.442695
    %v382 = vpow.pop %v381
    %v383 = vadd.f32 %v382, 1.0
    %v384 = vrcp.pop %v383
    %v385 = vmul.f32 1.0, %v384
    %v386 = vrot.slane %v370, 4
    %v388 = vtanh.pop %v386
    %v389 = vrot.slane %v370, 6
    %v391 = vxor.u32 %v389, 2147483648
    %v392 = vmul.f32 %v391, 1.442695
    %v393 = vpow.pop %v392
    %v394 = vadd.f32 %v393, 1.0
    %v395 = vrcp.pop %v394
    %v396 = vmul.f32 1.0, %v395
    %v397 = vmul.f32 %v385, %v205
    %v398 = vmul.f32 %v376, %v388
    %v399 = vadd.f32 %v397, %v398
    %v400 = vtanh.pop %v399
    %v401 = vmul.f32 %v396, %v400
    %402 = vst [vmem:[#allocation2] sm:$0x3] %v401
    %403 = vst [vmem:[#allocation3] sm:$0x3] %v399
    %s404 = smul.u32 %s195, 2
    %s405 = scalar_lea.vmem %s4, %s404
    %406 = vst [vmem:[%s405] sm:$0x3] %v401
    %s407 = ssub.s32 7, %s195
    %s408 = smul.u32 %s407, 4
    %s409 = smul.addr %s408, 2
    %s410 = scalar_lea.vmem %s47, %s409
    %v411 = vld [vmem:[%s410] sm:$0xff]
    %v412 = vld [vmem:[#allocation4] sm:$0x3]
    %v413 = vld [vmem:[#allocation5] sm:$0x3]
    %414 = vmatprep.subr.mxu0 %v131
    %415 = vmatpush1.msra.mxu0 %v130
    %416 = vmatprep.subr.mxu0 %v135
    %417 = vmatpush1.msra.mxu0 %v134
    %418 = vmatprep.subr.mxu0 %v139
    %419 = vmatpush1.msra.mxu0 %v138
    %420 = vmatprep.subr.mxu0 %v143
    %421 = vmatpush1.msra.mxu0 %v142
    %422 = vmatprep.subr.mxu0 %v147
    %423 = vmatpush1.msra.mxu0 %v146
    %424 = vmatprep.subr.mxu0 %v151
    %425 = vmatpush1.msra.mxu0 %v150
    %426 = vmatprep.subr.mxu0 %v155
    %427 = vmatpush1.msra.mxu0 %v154
    %428 = vmatprep.subr.mxu0 %v159
    %429 = vmatpush1.msra.mxu0 %v158
    %430 = vmatprep.subr.mxu0 %v163
    %431 = vmatpush1.msra.mxu0 %v162
    %432 = vmatprep.subr.mxu0 %v167
    %433 = vmatpush1.msra.mxu0 %v166
    %434 = vmatprep.subr.mxu0 %v171
    %435 = vmatpush1.msra.mxu0 %v170
    %436 = vmatprep.subr.mxu0 %v175
    %437 = vmatpush1.msra.mxu0 %v174
    %438 = vmatprep.subr.mxu0 %v179
    %439 = vmatpush1.msra.mxu0 %v178
    %440 = vmatprep.subr.mxu0 %v183
    %441 = vmatpush1.msra.mxu0 %v182
    %442 = vmatprep.subr.mxu0 %v187
    %443 = vmatpush1.msra.mxu0 %v186
    %444 = vmatprep.subr.mxu0 %v191
    %445 = vmatpush1.msra.mxu0 %v190
    %446 = vmatprep.subr.mxu0 0.0
    %447 = vmatpush1.msra.mxu0 0.0
    %448 = vmatprep.subr.mxu0 0.0
    %449 = vmatpush1.msra.mxu0 0.0
    %450 = vmatprep.subr.mxu0 0.0
    %451 = vmatpush1.msra.mxu0 0.0
    %452 = vmatprep.subr.mxu0 0.0
    %453 = vmatpush1.msra.mxu0 0.0
    %454 = vmatprep.subr.mxu0 0.0
    %455 = vmatpush1.msra.mxu0 0.0
    %456 = vmatprep.subr.mxu0 0.0
    %457 = vmatpush1.msra.mxu0 0.0
    %458 = vmatprep.subr.mxu0 0.0
    %459 = vmatpush1.msra.mxu0 0.0
    %460 = vmatprep.subr.mxu0 0.0
    %461 = vmatpush1.msra.mxu0 0.0
    %462 = vmatprep.subr.mxu0 0.0
    %463 = vmatpush1.msra.mxu0 0.0
    %464 = vmatprep.subr.mxu0 0.0
    %465 = vmatpush1.msra.mxu0 0.0
    %466 = vmatprep.subr.mxu0 0.0
    %467 = vmatpush1.msra.mxu0 0.0
    %468 = vmatprep.subr.mxu0 0.0
    %469 = vmatpush1.msra.mxu0 0.0
    %470 = vmatprep.subr.mxu0 0.0
    %471 = vmatpush1.msra.mxu0 0.0
    %472 = vmatprep.subr.mxu0 0.0
    %473 = vmatpush1.msra.mxu0 0.0
    %474 = vmatprep.subr.mxu0 0.0
    %475 = vmatpush1.msra.mxu0 0.0
    %476 = vmatprep.subr.mxu0 0.0
    %477 = vmatpush1.msra.mxu0 0.0
    %478 = vmatprep.mubr.f32.mxu0 0.0
    %479 = vmatmul.mubr.f32.gmra.mrb[0].mxu0 %v412
    %v480 = vpop.f32.mrb[0].mxu0
    %v481 = vadd.f32 0.0, %v480
    %v482 = vpop.f32.mrb[0].mxu0
    %v483 = vadd.f32 0.0, %v482
    %484 = vdwg.mxu0
    %485 = vmatprep.subr.mxu0 %v133
    %486 = vmatpush1.msra.mxu0 %v132
    %487 = vmatprep.subr.mxu0 %v137
    %488 = vmatpush1.msra.mxu0 %v136
    %489 = vmatprep.subr.mxu0 %v141
    %490 = vmatpush1.msra.mxu0 %v140
    %491 = vmatprep.subr.mxu0 %v145
    %492 = vmatpush1.msra.mxu0 %v144
    %493 = vmatprep.subr.mxu0 %v149
    %494 = vmatpush1.msra.mxu0 %v148
    %495 = vmatprep.subr.mxu0 %v153
    %496 = vmatpush1.msra.mxu0 %v152
    %497 = vmatprep.subr.mxu0 %v157
    %498 = vmatpush1.msra.mxu0 %v156
    %499 = vmatprep.subr.mxu0 %v161
    %500 = vmatpush1.msra.mxu0 %v160
    %501 = vmatprep.subr.mxu0 %v165
    %502 = vmatpush1.msra.mxu0 %v164
    %503 = vmatprep.subr.mxu0 %v169
    %504 = vmatpush1.msra.mxu0 %v168
    %505 = vmatprep.subr.mxu0 %v173
    %506 = vmatpush1.msra.mxu0 %v172
    %507 = vmatprep.subr.mxu0 %v177
    %508 = vmatpush1.msra.mxu0 %v176
    %509 = vmatprep.subr.mxu0 %v181
    %510 = vmatpush1.msra.mxu0 %v180
    %511 = vmatprep.subr.mxu0 %v185
    %512 = vmatpush1.msra.mxu0 %v184
    %513 = vmatprep.subr.mxu0 %v189
    %514 = vmatpush1.msra.mxu0 %v188
    %515 = vmatprep.subr.mxu0 %v193
    %516 = vmatpush1.msra.mxu0 %v192
    %517 = vmatprep.subr.mxu0 0.0
    %518 = vmatpush1.msra.mxu0 0.0
    %519 = vmatprep.subr.mxu0 0.0
    %520 = vmatpush1.msra.mxu0 0.0
    %521 = vmatprep.subr.mxu0 0.0
    %522 = vmatpush1.msra.mxu0 0.0
    %523 = vmatprep.subr.mxu0 0.0
    %524 = vmatpush1.msra.mxu0 0.0
    %525 = vmatprep.subr.mxu0 0.0
    %526 = vmatpush1.msra.mxu0 0.0
    %527 = vmatprep.subr.mxu0 0.0
    %528 = vmatpush1.msra.mxu0 0.0
    %529 = vmatprep.subr.mxu0 0.0
    %530 = vmatpush1.msra.mxu0 0.0
    %531 = vmatprep.subr.mxu0 0.0
    %532 = vmatpush1.msra.mxu0 0.0
    %533 = vmatprep.subr.mxu0 0.0
    %534 = vmatpush1.msra.mxu0 0.0
    %535 = vmatprep.subr.mxu0 0.0
    %536 = vmatpush1.msra.mxu0 0.0
    %537 = vmatprep.subr.mxu0 0.0
    %538 = vmatpush1.msra.mxu0 0.0
    %539 = vmatprep.subr.mxu0 0.0
    %540 = vmatpush1.msra.mxu0 0.0
    %541 = vmatprep.subr.mxu0 0.0
    %542 = vmatpush1.msra.mxu0 0.0
    %543 = vmatprep.subr.mxu0 0.0
    %544 = vmatpush1.msra.mxu0 0.0
    %545 = vmatprep.subr.mxu0 0.0
    %546 = vmatpush1.msra.mxu0 0.0
    %547 = vmatprep.subr.mxu0 0.0
    %548 = vmatpush1.msra.mxu0 0.0
    %549 = vmatprep.mubr.f32.mxu0 0.0
    %550 = vmatmul.mubr.f32.gmra.mrb[0].mxu0 %v412
    %v551 = vpop.f32.mrb[0].mxu0
    %v552 = vadd.f32 0.0, %v551
    %v553 = vpop.f32.mrb[0].mxu0
    %v554 = vadd.f32 0.0, %v553
    %555 = vdwg.mxu0
    %v560 = vcombine.low %v481, %v483
    %v561 = vcombine.low %v552, %v554
    %v563 = vunpack.c.l.s4 1983009808
    %v564 = vunpack.c.0.s8 %v563
    %v565 = vlaneseq
    %v566 = vshrl.u32 %v565, 7
    %v567 = vsub.s32 %v564, %v566
    %v568 = vrot.slane %v560, %v567
    %v570 = vunpack.c.l.s4 1983009808
    %v571 = vunpack.c.0.s8 %v570
    %v572 = vlaneseq
    %v573 = vshrl.u32 %v572, 7
    %v574 = vsub.s32 %v571, %v573
    %v575 = vrot.slane %v561, %v574
    %v576 = vcombine.low %v568, %v575
    %v578 = vadd.f32 %v411, %v576
    %v579 = vxor.u32 %v578, 2147483648
    %v580 = vmul.f32 %v579, 1.442695
    %v581 = vpow.pop %v580
    %v582 = vadd.f32 %v581, 1.0
    %v583 = vrcp.pop %v582
    %v584 = vmul.f32 1.0, %v583
    %v586 = vrot.slane %v578, 2
    %v588 = vxor.u32 %v586, 2147483648
    %v589 = vmul.f32 %v588, 1.442695
    %v590 = vpow.pop %v589
    %v591 = vadd.f32 %v590, 1.0
    %v592 = vrcp.pop %v591
    %v593 = vmul.f32 1.0, %v592
    %v594 = vrot.slane %v578, 4
    %v596 = vtanh.pop %v594
    %v597 = vrot.slane %v578, 6
    %v599 = vxor.u32 %v597, 2147483648
    %v600 = vmul.f32 %v599, 1.442695
    %v601 = vpow.pop %v600
    %v602 = vadd.f32 %v601, 1.0
    %v603 = vrcp.pop %v602
    %v604 = vmul.f32 1.0, %v603
    %v605 = vmul.f32 %v593, %v413
    %v606 = vmul.f32 %v584, %v596
    %v607 = vadd.f32 %v605, %v606
    %v608 = vtanh.pop %v607
    %v609 = vmul.f32 %v604, %v608
    %610 = vst [vmem:[#allocation4] sm:$0x3] %v609
    %611 = vst [vmem:[#allocation5] sm:$0x3] %v607
    %s612 = smul.u32 %s407, 2
    %s613 = scalar_lea.vmem %s55, %s612
    %614 = vst [vmem:[%s613] sm:$0x3] %v609
  $region26: #{encoder_with_rnn.2} parent=0 // loop_footer
    %s199 = sadd.s32 1, %s195
  $region27: #{encoder_with_rnn.2} parent=0 // loop_footer_branch
    %194 = sbr.rel target = $region23
  $region28: #{encoder_with_rnn.2} parent=0 // loop_exit
    _
  %s615 = ssub.s32 0, 0
  %s616 = smul.u32 8, %s615
  %p617 = scmp.lt.s32.totalorder %s616, 7
  %s618 = scalar_select %p617, %s616, 7
  %s619 = smul.addr %s618, 2
  %s620 = scalar_lea.vmem %s5, %s619
  // Predicated region
  $region29: #{encoder_with_rnn.2} parent=0 // pred_check
    _
  $region30: #{encoder_with_rnn.2} parent=0 // pred_check_branch
    %622 = sbr.rel (0) target = $region32
  $region31: #{encoder_with_rnn.2} parent=0 // pred_region
    _
  $region32: #{encoder_with_rnn.2} parent=0 // pred_fallthru
    _
  // Predicated region
  $region33: #{encoder_with_rnn.2} parent=0 // pred_check
    _
  $region34: #{encoder_with_rnn.2} parent=0 // pred_check_branch
    %624 = sbr.rel (0) target = $region36
  $region35: #{encoder_with_rnn.2} parent=0 // pred_region
    %s625 = ssub.s32 0, 0
    %s626 = smul.u32 8, %s625
  $region36: #{encoder_with_rnn.2} parent=0 // pred_fallthru
    _
  // Predicated region
  $region37: #{encoder_with_rnn.2} parent=0 // pred_check
    _
  $region38: #{encoder_with_rnn.2} parent=0 // pred_check_branch
    %628 = sbr.rel (0) target = $region40
  $region39: #{encoder_with_rnn.2} parent=0 // pred_region
    _
  $region40: #{encoder_with_rnn.2} parent=0 // pred_fallthru
    _
  // Predicated region
  $region41: #{encoder_with_rnn.2} parent=0 // pred_check
    _
  $region42: #{encoder_with_rnn.2} parent=0 // pred_check_branch
    %630 = sbr.rel (0) target = $region44
  $region43: #{encoder_with_rnn.2} parent=0 // pred_region
    %s631 = ssub.s32 0, 0
    %s632 = smul.u32 8, %s631
    %p633 = scmp.lt.s32.totalorder %s632, 7
    %s634 = scalar_select %p633, %s632, 7
    %s635 = smul.addr %s634, 2
    %s636 = scalar_lea.vmem %s5, %s635
  $region44: #{encoder_with_rnn.2} parent=0 // pred_fallthru
    _

</llo_original>
